<compile_context>
chip_gen: v7x
topology: tpu7x:2x2x1
jax: 0.10.0
libtpu: 0.0.40
codegen_flags: <defaults>
</compile_context>

<pallas_src>
import jax
import jax.numpy as jnp
from jax import lax
from jax.experimental import pallas as pl
from jax.experimental.pallas import tpu as pltpu


def qnetwork_kernel(x_ref, w1_ref, b1_ref, w2_ref, b2_ref, out_ref):
    # x_ref: [tile_b, S] in natural (row) layout — no wrapper transpose.
    # h^T = relu(W1 @ x^T + b1)  -> [H, tile_b], lane-dense along batch.
    h = lax.dot_general(
        w1_ref[...], x_ref[...],
        dimension_numbers=(((1,), (1,)), ((), ())),   # contract S with S
        preferred_element_type=jnp.float32)
    h = jnp.maximum(h + b1_ref[...], 0.0)             # [H,1] broadcast over lanes
    # out^T = W2 @ h^T + b2      -> [A, tile_b], lane-dense store.
    o = jnp.dot(w2_ref[...], h, preferred_element_type=jnp.float32)
    out_ref[...] = (o + b2_ref[...]).astype(out_ref.dtype)


def _round_up(x, m):
    return ((x + m - 1) // m) * m


def qnetwork_forward(x, w1, b1, w2, b2, *, tile_b_max=8192,
                     min_pallas_batch=256, transposed_output=False):
    """x: [B, S]; w1: [H, S]; b1: [H]; w2: [A, H]; b2: [A]  (PyTorch layout).

    Returns [B, A] = fc2(relu(fc1(x)))  (or [A, B] if transposed_output=True,
    letting a layout-agnostic consumer skip one HBM pass over the result).
    """
    B, S = x.shape
    H = w1.shape[0]
    A = w2.shape[0]

    # Small-batch escape hatch: a fused XLA expression wins outright here.
    if B < min_pallas_batch:
        out = jnp.maximum(x @ w1.T + b1, 0.0) @ w2.T + b2
        return out.T if transposed_output else out

    # Step count first (minimizes padding waste), then a 128-aligned tile.
    # Ensure >= 2 steps once B >= 256 so the "parallel" axis can split across
    # both TensorCores on v7x (no-op on single-TC v5e/v6e).
    n = max(1, pl.cdiv(B, tile_b_max))
    if B >= 256 and n == 1:
        n = 2
    tile_b = _round_up(pl.cdiv(B, n), 128)
    b_pad = n * tile_b
    grid = (n,)

    if b_pad != B:
        x = jnp.pad(x, ((0, b_pad - B), (0, 0)))      # padded rows sliced off below
    b1c = b1.reshape(H, 1)
    b2c = b2.reshape(A, 1)

    flops = 2 * b_pad * (S * H + H * A)
    bytes_accessed = 4 * (b_pad * S + A * b_pad + H * S + A * H + H + A)

    out_t = pl.pallas_call(
        qnetwork_kernel,
        out_shape=jax.ShapeDtypeStruct((A, b_pad), jnp.float32),
        grid_spec=pltpu.PrefetchScalarGridSpec(
            num_scalar_prefetch=0,
            grid=grid,
            in_specs=[
                pl.BlockSpec((tile_b, S), lambda i: (i, 0)),   # x streams, natural layout
                pl.BlockSpec((H, S), lambda i: (0, 0)),        # W1 resident
                pl.BlockSpec((H, 1), lambda i: (0, 0)),        # b1 resident
                pl.BlockSpec((A, H), lambda i: (0, 0)),        # W2 resident
                pl.BlockSpec((A, 1), lambda i: (0, 0)),        # b2 resident
            ],
            out_specs=pl.BlockSpec((A, tile_b), lambda i: (0, i)),
        ),
        compiler_params=pltpu.CompilerParams(
            dimension_semantics=("parallel",),   # megacore split on v7x
        ),
        cost_estimate=pl.CostEstimate(
            flops=flops, transcendentals=0, bytes_accessed=bytes_accessed),
    )(x, w1, b1c, w2, b2c)

    out_t = out_t[:, :B]                                 # drop padded columns
    return out_t if transposed_output else out_t.T       # [B, A] by default


def init_params(key, state_size, action_size, hidden=64):
    # PyTorch nn.Linear layout: weight [out, in], bias [out];
    # init U(-1/sqrt(fan_in), +1/sqrt(fan_in)).
    k1, k2, k3, k4 = jax.random.split(key, 4)
    bound1 = 1.0 / jnp.sqrt(state_size)
    bound2 = 1.0 / jnp.sqrt(hidden)
    w1 = jax.random.uniform(k1, (hidden, state_size), jnp.float32, -bound1, bound1)
    b1 = jax.random.uniform(k2, (hidden,), jnp.float32, -bound1, bound1)
    w2 = jax.random.uniform(k3, (action_size, hidden), jnp.float32, -bound2, bound2)
    b2 = jax.random.uniform(k4, (action_size,), jnp.float32, -bound2, bound2)
    return w1, b1, w2, b2


if __name__ == "__main__":
    key = jax.random.PRNGKey(0)
    k_x, k_p = jax.random.split(key)

    batch = 8
    state_size = 16
    action_size = 4

    x = jax.random.normal(k_x, (batch, state_size), jnp.float32)
    w1, b1, w2, b2 = init_params(k_p, state_size, action_size)
    ref = jnp.maximum(x @ w1.T + b1, 0.0) @ w2.T + b2

    # 1) Force the Pallas path at the small batch (exercise the kernel itself).
    out = qnetwork_forward(x, w1, b1, w2, b2, min_pallas_batch=0)
    out = jax.block_until_ready(out)
    assert out.shape == (batch, action_size)
    assert jnp.allclose(out, ref, atol=1e-4, rtol=1e-4), (
        float(jnp.max(jnp.abs(out - ref))))

    # 2) Default dispatch at the small batch takes the fused-XLA escape hatch.
    out_xla = jax.block_until_ready(qnetwork_forward(x, w1, b1, w2, b2))
    assert jnp.allclose(out_xla, ref, atol=1e-5, rtol=1e-5)

    # 3) Larger, non-multiple batch: Pallas path, 2 grid steps, minimal padding.
    xb = jax.random.normal(k_x, (1000, state_size), jnp.float32)
    outb = jax.block_until_ready(qnetwork_forward(xb, w1, b1, w2, b2))
    refb = jnp.maximum(xb @ w1.T + b1, 0.0) @ w2.T + b2
    assert outb.shape == (1000, action_size)
    assert jnp.allclose(outb, refb, atol=1e-4, rtol=1e-4)

    # 4) Transposed-output mode (consumer-side layout): [A, B].
    outb_t = jax.block_until_ready(
        qnetwork_forward(xb, w1, b1, w2, b2, transposed_output=True))
    assert outb_t.shape == (action_size, 1000)
    assert jnp.allclose(outb_t.T, refb, atol=1e-4, rtol=1e-4)

    print("KERNEL_OK")
</pallas_src>

<mosaic_0001>
module attributes {stable_mosaic.version = 11 : i64} {
  func.func @qnetwork_kernel(%arg0: i32, %arg1: memref<128x16xf32, #tpu.memory_space<vmem>>, %arg2: memref<64x16xf32, #tpu.memory_space<vmem>>, %arg3: memref<64x1xf32, #tpu.memory_space<vmem>>, %arg4: memref<4x64xf32, #tpu.memory_space<vmem>>, %arg5: memref<4x1xf32, #tpu.memory_space<vmem>>, %arg6: memref<4x128xf32, #tpu.memory_space<vmem>>) attributes {dimension_semantics = [#tpu.dimension_semantics<parallel>], iteration_bounds = array<i64: 1>, scalar_prefetch = 0 : i64, scratch_operands = 0 : i64, tpu.core_type = #tpu.core_type<tc>, window_params = [{transform_indices = @transform_0, window_bounds = array<i64: 128, 16>}, {pipeline_mode = #tpu.pipeline_mode<synchronous>, transform_indices = @transform_1, window_bounds = array<i64: 64, 16>}, {pipeline_mode = #tpu.pipeline_mode<synchronous>, transform_indices = @transform_2, window_bounds = array<i64: 64, 1>}, {pipeline_mode = #tpu.pipeline_mode<synchronous>, transform_indices = @transform_3, window_bounds = array<i64: 4, 64>}, {pipeline_mode = #tpu.pipeline_mode<synchronous>, transform_indices = @transform_4, window_bounds = array<i64: 4, 1>}, {transform_indices = @transform_5, window_bounds = array<i64: 4, 128>}]} {
    %c0 = arith.constant 0 : index
    %c0_0 = arith.constant 0 : index
    %0 = vector.load %arg2[%c0, %c0_0] : memref<64x16xf32, #tpu.memory_space<vmem>>, vector<64x16xf32>
    %c0_1 = arith.constant 0 : index
    %c0_2 = arith.constant 0 : index
    %1 = vector.load %arg1[%c0_1, %c0_2] : memref<128x16xf32, #tpu.memory_space<vmem>>, vector<128x16xf32>
    %cst = arith.constant dense<0.000000e+00> : vector<64x128xf32>
    %2 = tpu.matmul %0, %1, %cst {dimension_numbers = #tpu.dot_dimension_numbers<[1], [1], [0], [0], [0, 0, 1, 0], [], []>} : vector<64x16xf32>, vector<128x16xf32>, vector<64x128xf32> -> vector<64x128xf32>
    %c0_3 = arith.constant 0 : index
    %c0_4 = arith.constant 0 : index
    %3 = vector.load %arg3[%c0_3, %c0_4] : memref<64x1xf32, #tpu.memory_space<vmem>>, vector<64x1xf32>
    %4 = vector.broadcast %3 : vector<64x1xf32> to vector<64x128xf32>
    %5 = arith.addf %2, %4 : vector<64x128xf32>
    %cst_5 = arith.constant 0.000000e+00 : f32
    %6 = vector.broadcast %cst_5 : f32 to vector<64x128xf32>
    %7 = arith.maximumf %5, %6 : vector<64x128xf32>
    %c0_6 = arith.constant 0 : index
    %c0_7 = arith.constant 0 : index
    %8 = vector.load %arg4[%c0_6, %c0_7] : memref<4x64xf32, #tpu.memory_space<vmem>>, vector<4x64xf32>
    %cst_8 = arith.constant dense<0.000000e+00> : vector<4x128xf32>
    %9 = tpu.matmul %8, %7, %cst_8 {dimension_numbers = #tpu.dot_dimension_numbers<[1], [0], [0], [1], [0, 0, 1, 1], [], []>} : vector<4x64xf32>, vector<64x128xf32>, vector<4x128xf32> -> vector<4x128xf32>
    %c0_9 = arith.constant 0 : index
    %c0_10 = arith.constant 0 : index
    %10 = vector.load %arg5[%c0_9, %c0_10] : memref<4x1xf32, #tpu.memory_space<vmem>>, vector<4x1xf32>
    %11 = vector.broadcast %10 : vector<4x1xf32> to vector<4x128xf32>
    %12 = arith.addf %9, %11 : vector<4x128xf32>
    %c0_11 = arith.constant 0 : index
    %c0_12 = arith.constant 0 : index
    %13 = vector.load %arg6[%c0_11, %c0_12] : memref<4x128xf32, #tpu.memory_space<vmem>>, vector<4x128xf32>
    tpu.vector_store %arg6[%c0_11, %c0_12], %12 {strides = array<i32>} : memref<4x128xf32, #tpu.memory_space<vmem>>, vector<4x128xf32>,
    return
  }
  func.func @transform_0(%arg0: i32) -> (i32, i32) {
    %c0_i32 = arith.constant 0 : i32
    %c0_i32_0 = arith.constant 0 : i32
    return %arg0, %c0_i32 : i32, i32
  }
  func.func @transform_1(%arg0: i32) -> (i32, i32) {
    %c0_i32 = arith.constant 0 : i32
    %c0_i32_0 = arith.constant 0 : i32
    %c0_i32_1 = arith.constant 0 : i32
    return %c0_i32, %c0_i32_0 : i32, i32
  }
  func.func @transform_2(%arg0: i32) -> (i32, i32) {
    %c0_i32 = arith.constant 0 : i32
    %c0_i32_0 = arith.constant 0 : i32
    %c0_i32_1 = arith.constant 0 : i32
    return %c0_i32, %c0_i32_0 : i32, i32
  }
  func.func @transform_3(%arg0: i32) -> (i32, i32) {
    %c0_i32 = arith.constant 0 : i32
    %c0_i32_0 = arith.constant 0 : i32
    %c0_i32_1 = arith.constant 0 : i32
    return %c0_i32, %c0_i32_0 : i32, i32
  }
  func.func @transform_4(%arg0: i32) -> (i32, i32) {
    %c0_i32 = arith.constant 0 : i32
    %c0_i32_0 = arith.constant 0 : i32
    %c0_i32_1 = arith.constant 0 : i32
    return %c0_i32, %c0_i32_0 : i32, i32
  }
  func.func @transform_5(%arg0: i32) -> (i32, i32) {
    %c0_i32 = arith.constant 0 : i32
    %c0_i32_0 = arith.constant 0 : i32
    return %c0_i32, %arg0 : i32, i32
  }
}

</mosaic_0001>

<llo_original>
// kernel: tpu_custom_call.1
$region0: #{tpu_custom_call.1}
  #allocation0 [shape = 'u32[]', space=smem, size = 0x4, offset = 0x4, fixed_abs, tag = 'smem constant byte address 0x4 - core index']
  #allocation1 [shape = 'u32[144,128]{1,0:T(1,128)}', space=vmem, size = 0x12000, scoped, tag = 'internal scratch']
  %s0 = inlined_call_operand.vmem [shape: f32[128,16], index: 0, kind: input, shape index: {}]
  %s1 = inlined_call_operand.vmem [shape: f32[64,16], index: 1, kind: input, shape index: {}]
  %s2 = inlined_call_operand.vmem [shape: f32[64,1], index: 2, kind: input, shape index: {}]
  %s3 = inlined_call_operand.vmem [shape: f32[4,64], index: 3, kind: input, shape index: {}]
  %s4 = inlined_call_operand.vmem [shape: f32[4,1], index: 4, kind: input, shape index: {}]
  %s5 = inlined_call_operand.hbm [shape: f32[4,128], index: 5, kind: output, shape index: {}]
  %s6 = sld [smem:[#allocation0]]
  $region30: #{tpu_custom_call.1} parent=0
    _
  %s8 = ssub.s32 1, %s6
  %s9 = scalar_select 0, %s8, %s6
  $region1: #{tpu_custom_call.1} parent=0
    #allocation2 [shape = 'u8[2048]{0}', space=vmem, size = 0x800, scoped, tag = 'output window, operand 0, single buffered']
    #allocation3 [shape = 's32[1]{0}', space=sflag, size = 0x4, scoped, tag = 'scoped memory for tpu_custom_call.1']
    %10 = vsyncpa [#allocation3], 0
    // Predicated region
    $region2: #{tpu_custom_call.1} parent=1 // pred_check
      _
    $region3: #{tpu_custom_call.1} parent=1 // pred_check_branch
      %12 = sbr.rel (0) target = $region5
    $region4: #{tpu_custom_call.1} parent=1 // pred_region
      _
    $region5: #{tpu_custom_call.1} parent=1 // pred_fallthru
      _
    // Predicated region
    $region6: #{tpu_custom_call.1} parent=1 // pred_check
      _
    $region7: #{tpu_custom_call.1} parent=1 // pred_check_branch
      %14 = sbr.rel (0) target = $region9
    $region8: #{tpu_custom_call.1} parent=1 // pred_region
      _
    $region9: #{tpu_custom_call.1} parent=1 // pred_fallthru
      _
    // Predicated region
    $region10: #{tpu_custom_call.1} parent=1 // pred_check
      _
    $region11: #{tpu_custom_call.1} parent=1 // pred_check_branch
      %16 = sbr.rel (0) target = $region13
    $region12: #{tpu_custom_call.1} parent=1 // pred_region
      _
    $region13: #{tpu_custom_call.1} parent=1 // pred_fallthru
      _
    // Predicated region
    $region14: #{tpu_custom_call.1} parent=1 // pred_check
      _
    $region15: #{tpu_custom_call.1} parent=1 // pred_check_branch
      %18 = sbr.rel (0) target = $region17
    $region16: #{tpu_custom_call.1} parent=1 // pred_region
      _
    $region17: #{tpu_custom_call.1} parent=1 // pred_fallthru
      _
    // Predicated region
    $region18: #{tpu_custom_call.1} parent=1 // pred_check
      _
    $region19: #{tpu_custom_call.1} parent=1 // pred_check_branch
      %20 = sbr.rel (0) target = $region21
    $region20: #{tpu_custom_call.1} parent=1 // pred_region
      _
    $region21: #{tpu_custom_call.1} parent=1 // pred_fallthru
      _
    %v21 = vld [vmem:[%s1] sm:$0xff]
    %v22 = vld [vmem:[%s1 + $0x8] sm:$0xff]
    %v23 = vld [vmem:[%s1 + $0x10] sm:$0xff]
    %v24 = vld [vmem:[%s1 + $0x18] sm:$0xff]
    %v25 = vld [vmem:[%s1 + $0x20] sm:$0xff]
    %v26 = vld [vmem:[%s1 + $0x28] sm:$0xff]
    %v27 = vld [vmem:[%s1 + $0x30] sm:$0xff]
    %v28 = vld [vmem:[%s1 + $0x38] sm:$0xff]
    %v29 = vld [vmem:[%s0] sm:$0xff]
    %v30 = vld [vmem:[%s0 + $0x8] sm:$0xff]
    %v31 = vld [vmem:[%s0 + $0x10] sm:$0xff]
    %v32 = vld [vmem:[%s0 + $0x18] sm:$0xff]
    %v33 = vld [vmem:[%s0 + $0x20] sm:$0xff]
    %v34 = vld [vmem:[%s0 + $0x28] sm:$0xff]
    %v35 = vld [vmem:[%s0 + $0x30] sm:$0xff]
    %v36 = vld [vmem:[%s0 + $0x38] sm:$0xff]
    %v37 = vld [vmem:[%s0 + $0x40] sm:$0xff]
    %v38 = vld [vmem:[%s0 + $0x48] sm:$0xff]
    %v39 = vld [vmem:[%s0 + $0x50] sm:$0xff]
    %v40 = vld [vmem:[%s0 + $0x58] sm:$0xff]
    %v41 = vld [vmem:[%s0 + $0x60] sm:$0xff]
    %v42 = vld [vmem:[%s0 + $0x68] sm:$0xff]
    %v43 = vld [vmem:[%s0 + $0x70] sm:$0xff]
    %v44 = vld [vmem:[%s0 + $0x78] sm:$0xff]
    %v45 = vld [vmem:[%s2] sm:$0xff]
    %v46 = vld [vmem:[%s2 + $0x8] sm:$0xff]
    %v47 = vld [vmem:[%s2 + $0x10] sm:$0xff]
    %v48 = vld [vmem:[%s2 + $0x18] sm:$0xff]
    %v49 = vld [vmem:[%s2 + $0x20] sm:$0xff]
    %v50 = vld [vmem:[%s2 + $0x28] sm:$0xff]
    %v51 = vld [vmem:[%s2 + $0x30] sm:$0xff]
    %v52 = vld [vmem:[%s2 + $0x38] sm:$0xff]
    %54 = vset.pattern.permute.xlu0 0
    %55 = vperm.xlu0 %54, %v45
    %v56 = vpop.permute.xlu0 %55
    %59 = vset.pattern.permute.xlu0 0
    %60 = vperm.xlu0 %59, %v46
    %v61 = vpop.permute.xlu0 %60
    %64 = vset.pattern.permute.xlu0 0
    %65 = vperm.xlu0 %64, %v47
    %v66 = vpop.permute.xlu0 %65
    %69 = vset.pattern.permute.xlu0 0
    %70 = vperm.xlu0 %69, %v48
    %v71 = vpop.permute.xlu0 %70
    %74 = vset.pattern.permute.xlu0 0
    %75 = vperm.xlu0 %74, %v49
    %v76 = vpop.permute.xlu0 %75
    %79 = vset.pattern.permute.xlu0 0
    %80 = vperm.xlu0 %79, %v50
    %v81 = vpop.permute.xlu0 %80
    %84 = vset.pattern.permute.xlu0 0
    %85 = vperm.xlu0 %84, %v51
    %v86 = vpop.permute.xlu0 %85
    %89 = vset.pattern.permute.xlu0 0
    %90 = vperm.xlu0 %89, %v52
    %v91 = vpop.permute.xlu0 %90
    %vm93 = vcmask 130048
    %v95 = vsel %vm93, %v21, 0
    %v98 = vsel %vm93, %v22, 0
    %v101 = vsel %vm93, %v23, 0
    %v104 = vsel %vm93, %v24, 0
    %v107 = vsel %vm93, %v25, 0
    %v110 = vsel %vm93, %v26, 0
    %v113 = vsel %vm93, %v27, 0
    %v116 = vsel %vm93, %v28, 0
    %v119 = vsel %vm93, %v29, 0
    %v122 = vsel %vm93, %v30, 0
    %v125 = vsel %vm93, %v31, 0
    %v128 = vsel %vm93, %v32, 0
    %v131 = vsel %vm93, %v33, 0
    %v134 = vsel %vm93, %v34, 0
    %v137 = vsel %vm93, %v35, 0
    %v140 = vsel %vm93, %v36, 0
    %v143 = vsel %vm93, %v37, 0
    %v146 = vsel %vm93, %v38, 0
    %v149 = vsel %vm93, %v39, 0
    %v152 = vsel %vm93, %v40, 0
    %v155 = vsel %vm93, %v41, 0
    %v158 = vsel %vm93, %v42, 0
    %v161 = vsel %vm93, %v43, 0
    %v164 = vsel %vm93, %v44, 0
    %166 = vmatprep.subr.mxu0 0.0
    %167 = vmatpush1.xpose.msra.mxu0 %v119
    %168 = vmatprep.subr.mxu0 0.0
    %169 = vmatpush1.xpose.msra.mxu0 %v122
    %170 = vmatprep.subr.mxu0 0.0
    %171 = vmatpush1.xpose.msra.mxu0 %v125
    %172 = vmatprep.subr.mxu0 0.0
    %173 = vmatpush1.xpose.msra.mxu0 %v128
    %174 = vmatprep.subr.mxu0 0.0
    %175 = vmatpush1.xpose.msra.mxu0 %v131
    %176 = vmatprep.subr.mxu0 0.0
    %177 = vmatpush1.xpose.msra.mxu0 %v134
    %178 = vmatprep.subr.mxu0 0.0
    %179 = vmatpush1.xpose.msra.mxu0 %v137
    %180 = vmatprep.subr.mxu0 0.0
    %181 = vmatpush1.xpose.msra.mxu0 %v140
    %182 = vmatprep.subr.mxu0 0.0
    %183 = vmatpush1.xpose.msra.mxu0 %v143
    %184 = vmatprep.subr.mxu0 0.0
    %185 = vmatpush1.xpose.msra.mxu0 %v146
    %186 = vmatprep.subr.mxu0 0.0
    %187 = vmatpush1.xpose.msra.mxu0 %v149
    %188 = vmatprep.subr.mxu0 0.0
    %189 = vmatpush1.xpose.msra.mxu0 %v152
    %190 = vmatprep.subr.mxu0 0.0
    %191 = vmatpush1.xpose.msra.mxu0 %v155
    %192 = vmatprep.subr.mxu0 0.0
    %193 = vmatpush1.xpose.msra.mxu0 %v158
    %194 = vmatprep.subr.mxu0 0.0
    %195 = vmatpush1.xpose.msra.mxu0 %v161
    %196 = vmatprep.subr.mxu0 0.0
    %197 = vmatpush1.xpose.msra.mxu0 %v164
    %198 = vmatprep.subr.mxu0 0.0
    %199 = vmatpush1.xpose.msra.mxu0 0.0
    %200 = vmatprep.subr.mxu0 0.0
    %201 = vmatpush1.xpose.msra.mxu0 0.0
    %202 = vmatprep.subr.mxu0 0.0
    %203 = vmatpush1.xpose.msra.mxu0 0.0
    %204 = vmatprep.subr.mxu0 0.0
    %205 = vmatpush1.xpose.msra.mxu0 0.0
    %206 = vmatprep.subr.mxu0 0.0
    %207 = vmatpush1.xpose.msra.mxu0 0.0
    %208 = vmatprep.subr.mxu0 0.0
    %209 = vmatpush1.xpose.msra.mxu0 0.0
    %210 = vmatprep.subr.mxu0 0.0
    %211 = vmatpush1.xpose.msra.mxu0 0.0
    %212 = vmatprep.subr.mxu0 0.0
    %213 = vmatpush1.xpose.msra.mxu0 0.0
    %214 = vmatprep.subr.mxu0 0.0
    %215 = vmatpush1.xpose.msra.mxu0 0.0
    %216 = vmatprep.subr.mxu0 0.0
    %217 = vmatpush1.xpose.msra.mxu0 0.0
    %218 = vmatprep.subr.mxu0 0.0
    %219 = vmatpush1.xpose.msra.mxu0 0.0
    %220 = vmatprep.subr.mxu0 0.0
    %221 = vmatpush1.xpose.msra.mxu0 0.0
    %222 = vmatprep.subr.mxu0 0.0
    %223 = vmatpush1.xpose.msra.mxu0 0.0
    %224 = vmatprep.subr.mxu0 0.0
    %225 = vmatpush1.xpose.msra.mxu0 0.0
    %226 = vmatprep.subr.mxu0 0.0
    %227 = vmatpush1.xpose.msra.mxu0 0.0
    %228 = vmatprep.subr.mxu0 0.0
    %229 = vmatpush1.xpose.msra.mxu0 0.0
    %230 = vmatprep.mubr.f32.mxu0 0.0
    %231 = vmatmul.mubr.f32.gmra.mrb[0].mxu0 %v95
    %v232 = vpop.f32.mrb[0].mxu0
    %v233 = vadd.f32 %v56, %v232
    %v234 = vpop.f32.mrb[0].mxu0
    %235 = vmatprep.mubr.f32.mxu0 0.0
    %236 = vmatmul.mubr.f32.gmra.mrb[0].mxu0 %v98
    %v237 = vpop.f32.mrb[0].mxu0
    %v238 = vadd.f32 %v61, %v237
    %v239 = vpop.f32.mrb[0].mxu0
    %240 = vmatprep.mubr.f32.mxu0 0.0
    %241 = vmatmul.mubr.f32.gmra.mrb[0].mxu0 %v101
    %v242 = vpop.f32.mrb[0].mxu0
    %v243 = vadd.f32 %v66, %v242
    %v244 = vpop.f32.mrb[0].mxu0
    %245 = vmatprep.mubr.f32.mxu0 0.0
    %246 = vmatmul.mubr.f32.gmra.mrb[0].mxu0 %v104
    %v247 = vpop.f32.mrb[0].mxu0
    %v248 = vadd.f32 %v71, %v247
    %v249 = vpop.f32.mrb[0].mxu0
    %250 = vmatprep.mubr.f32.mxu0 0.0
    %251 = vmatmul.mubr.f32.gmra.mrb[0].mxu0 %v107
    %v252 = vpop.f32.mrb[0].mxu0
    %v253 = vadd.f32 %v76, %v252
    %v254 = vpop.f32.mrb[0].mxu0
    %255 = vmatprep.mubr.f32.mxu0 0.0
    %256 = vmatmul.mubr.f32.gmra.mrb[0].mxu0 %v110
    %v257 = vpop.f32.mrb[0].mxu0
    %v258 = vadd.f32 %v81, %v257
    %v259 = vpop.f32.mrb[0].mxu0
    %260 = vmatprep.mubr.f32.mxu0 0.0
    %261 = vmatmul.mubr.f32.gmra.mrb[0].mxu0 %v113
    %v262 = vpop.f32.mrb[0].mxu0
    %v263 = vadd.f32 %v86, %v262
    %v264 = vpop.f32.mrb[0].mxu0
    %265 = vmatprep.mubr.f32.mxu0 0.0
    %266 = vmatmul.mubr.f32.gmra.mrb[0].mxu0 %v116
    %v267 = vpop.f32.mrb[0].mxu0
    %v268 = vadd.f32 %v91, %v267
    %v269 = vpop.f32.mrb[0].mxu0
    %270 = vdwg.mxu0
    %v271 = vmax.f32 %v233, 0.0
    %v272 = vmax.f32 %v238, 0.0
    %v273 = vmax.f32 %v243, 0.0
    %v274 = vmax.f32 %v248, 0.0
    %v275 = vmax.f32 %v253, 0.0
    %v276 = vmax.f32 %v258, 0.0
    %v277 = vmax.f32 %v263, 0.0
    %v278 = vmax.f32 %v268, 0.0
    %v279 = vld [vmem:[%s3] sm:$0xf]
    %v280 = vld [vmem:[%s4] sm:$0xf]
    %282 = vset.pattern.permute.xlu0 0
    %283 = vperm.xlu0 %282, %v280
    %v284 = vpop.permute.xlu0 %283
    %vm286 = vcmask 523264
    %v288 = vsel %vm286, %v279, 0
    %290 = vmatprep.subr.mxu0 0.0
    %291 = vmatpush1.msra.mxu0 %v271
    %292 = vmatprep.subr.mxu0 0.0
    %293 = vmatpush1.msra.mxu0 %v272
    %294 = vmatprep.subr.mxu0 0.0
    %295 = vmatpush1.msra.mxu0 %v273
    %296 = vmatprep.subr.mxu0 0.0
    %297 = vmatpush1.msra.mxu0 %v274
    %298 = vmatprep.subr.mxu0 0.0
    %299 = vmatpush1.msra.mxu0 %v275
    %300 = vmatprep.subr.mxu0 0.0
    %301 = vmatpush1.msra.mxu0 %v276
    %302 = vmatprep.subr.mxu0 0.0
    %303 = vmatpush1.msra.mxu0 %v277
    %304 = vmatprep.subr.mxu0 0.0
    %305 = vmatpush1.msra.mxu0 %v278
    %306 = vmatprep.subr.mxu0 0.0
    %307 = vmatpush1.msra.mxu0 0.0
    %308 = vmatprep.subr.mxu0 0.0
    %309 = vmatpush1.msra.mxu0 0.0
    %310 = vmatprep.subr.mxu0 0.0
    %311 = vmatpush1.msra.mxu0 0.0
    %312 = vmatprep.subr.mxu0 0.0
    %313 = vmatpush1.msra.mxu0 0.0
    %314 = vmatprep.subr.mxu0 0.0
    %315 = vmatpush1.msra.mxu0 0.0
    %316 = vmatprep.subr.mxu0 0.0
    %317 = vmatpush1.msra.mxu0 0.0
    %318 = vmatprep.subr.mxu0 0.0
    %319 = vmatpush1.msra.mxu0 0.0
    %320 = vmatprep.subr.mxu0 0.0
    %321 = vmatpush1.msra.mxu0 0.0
    %322 = vmatprep.subr.mxu0 0.0
    %323 = vmatpush1.msra.mxu0 0.0
    %324 = vmatprep.subr.mxu0 0.0
    %325 = vmatpush1.msra.mxu0 0.0
    %326 = vmatprep.subr.mxu0 0.0
    %327 = vmatpush1.msra.mxu0 0.0
    %328 = vmatprep.subr.mxu0 0.0
    %329 = vmatpush1.msra.mxu0 0.0
    %330 = vmatprep.subr.mxu0 0.0
    %331 = vmatpush1.msra.mxu0 0.0
    %332 = vmatprep.subr.mxu0 0.0
    %333 = vmatpush1.msra.mxu0 0.0
    %334 = vmatprep.subr.mxu0 0.0
    %335 = vmatpush1.msra.mxu0 0.0
    %336 = vmatprep.subr.mxu0 0.0
    %337 = vmatpush1.msra.mxu0 0.0
    %338 = vmatprep.subr.mxu0 0.0
    %339 = vmatpush1.msra.mxu0 0.0
    %340 = vmatprep.subr.mxu0 0.0
    %341 = vmatpush1.msra.mxu0 0.0
    %342 = vmatprep.subr.mxu0 0.0
    %343 = vmatpush1.msra.mxu0 0.0
    %344 = vmatprep.subr.mxu0 0.0
    %345 = vmatpush1.msra.mxu0 0.0
    %346 = vmatprep.subr.mxu0 0.0
    %347 = vmatpush1.msra.mxu0 0.0
    %348 = vmatprep.subr.mxu0 0.0
    %349 = vmatpush1.msra.mxu0 0.0
    %350 = vmatprep.subr.mxu0 0.0
    %351 = vmatpush1.msra.mxu0 0.0
    %352 = vmatprep.subr.mxu0 0.0
    %353 = vmatpush1.msra.mxu0 0.0
    %354 = vmatprep.mubr.f32.mxu0 0.0
    %355 = vmatmul.mubr.f32.gmra.mrb[0].mxu0 %v288
    %v356 = vpop.f32.mrb[0].mxu0
    %v357 = vadd.f32 %v284, %v356
    %v358 = vpop.f32.mrb[0].mxu0
    %359 = vdwg.mxu0
    %360 = vst [vmem:[#allocation2] sm:$0xf] %v357
    // Predicated region
    $region22: #{tpu_custom_call.1} parent=1 // pred_check
      _
    $region23: #{tpu_custom_call.1} parent=1 // pred_check_branch
      %362 = sbr.rel (0) target = $region25
    $region24: #{tpu_custom_call.1} parent=1 // pred_region
      %s364 = ssub.s32 64, 64
      %365 = vsyncadd [#allocation3], %s364
      %s367 = sshll.u32 [#allocation2], 4
      %s368 = int_to_ptr.vmem [resolvable:$true] %s367
      %370 = dma.vmem_to_hbm [thread:$0]  %s368, 64, %s5, [#allocation3]
    $region25: #{tpu_custom_call.1} parent=1 // pred_fallthru
      _
    // Predicated region
    $region26: #{tpu_custom_call.1} parent=1 // pred_check
      _
    $region27: #{tpu_custom_call.1} parent=1 // pred_check_branch
      %372 = sbr.rel (0) target = $region29
    $region28: #{tpu_custom_call.1} parent=1 // pred_region
      %373 = dma.done [#allocation3], 64
    $region29: #{tpu_custom_call.1} parent=1 // pred_fallthru
      _
    %374 = vsyncpa [#allocation3], 1

</llo_original>
